<compile_context>
chip_gen: v7x
topology: tpu7x:2x2x1
jax: 0.10.0
libtpu: 0.0.40
codegen_flags: <defaults>
</compile_context>

<pallas_src>
import jax
import jax.numpy as jnp
from jax.experimental import pallas as pl
from jax.experimental.pallas import tpu as pltpu


def _round_up(x, m):
    return (x + m - 1) // m * m


def _im2col_matmul_kernel(p_ref, w_ref, b_ref, o_ref):
    """One (batch, row-tile) grid step.

    p_ref : (1, TM, Kp)     bf16 im2col patches (Kp = KH*KW*Cin, padded)
    w_ref : (Kp, Coutp)     bf16 weight slab (spatial taps folded into K)
    b_ref : (1, Coutp)      f32 bias
    o_ref : (1, TM, Coutp)  output tile (input dtype), lane-dense Coutp
    """
    acc = jnp.dot(p_ref[0], w_ref[...], preferred_element_type=jnp.float32)
    o_ref[0] = (acc + b_ref[...]).astype(o_ref.dtype)


def _resolve_padding(padding, KH, KW, strides):
    if padding == 'same':
        if strides != 1:
            # Mirror torch.nn.functional.conv2d semantics.
            raise ValueError("padding='same' is only supported with strides=1")
        ph0 = (KH - 1) // 2
        pw0 = (KW - 1) // 2
        return (ph0, KH - 1 - ph0), (pw0, KW - 1 - pw0)
    if padding == 'valid':
        return (0, 0), (0, 0)
    p = int(padding)
    return (p, p), (p, p)


def sparse_conv2d(x_nchw, kernel_oihw, bias, padding='same', strides=1):
    """Forward pass of SparseConv2D (== F.conv2d with dense-ified weights)."""
    N, Cin, H, W = x_nchw.shape
    Cout, Cin_k, KH, KW = kernel_oihw.shape
    assert Cin == Cin_k
    s = int(strides)
    (ph0, ph1), (pw0, pw1) = _resolve_padding(padding, KH, KW, s)

    Hp, Wp = H + ph0 + ph1, W + pw0 + pw1
    Ho = (Hp - KH) // s + 1
    Wo = (Wp - KW) // s + 1
    out_dtype = x_nchw.dtype

    # NCHW -> NHWC (channels on the 128-lane axis) and spatial pad.
    x = jnp.transpose(x_nchw, (0, 2, 3, 1))
    x_pad = jnp.pad(x, ((0, 0), (ph0, ph1), (pw0, pw1), (0, 0)))

    # ---- im2col in the wrapper (layout plumbing) -------------------------
    # Tap (kh, kw) for output (oh, ow) reads input (oh*s + kh, ow*s + kw).
    # Concatenating taps along channels in (kh, kw, cin) order matches the
    # HWIO-flattened weight slab below.  Strides are folded here, so only
    # the outputs that are kept get computed.
    taps = []
    for kh in range(KH):
        for kw in range(KW):
            taps.append(x_pad[:,
                              kh:kh + (Ho - 1) * s + 1:s,
                              kw:kw + (Wo - 1) * s + 1:s,
                              :])
    K = KH * KW * Cin
    M = Ho * Wo
    patches = jnp.concatenate(taps, axis=-1).reshape(N, M, K)

    # ---- TPU-friendly padding / tiling -----------------------------------
    # Lane-dense output (Coutp % 128), bf16-sublane-friendly contraction
    # (Kp % 16), and row tiles TM that (a) keep the f32 accumulator + output
    # tile around <= ~2 MiB (safe for v7x's 64 MiB VMEM / 32 MiB scoped
    # default with double-buffering) and (b) expose >= 2 row tiles for
    # megacore parallelism and pipelining whenever M is large enough.
    Coutp = _round_up(Cout, 128)
    Kp = _round_up(K, 16)
    if M < 128:
        TM = _round_up(M, 8)
    else:
        TM = min(1024, max(128, (2 * 1024 * 1024) // (Coutp * 4) // 128 * 128))
        TM = min(TM, _round_up((M + 1) // 2, 128))
    Mp = _round_up(M, TM)

    patches = jnp.pad(patches, ((0, 0), (0, Mp - M), (0, Kp - K)))
    patches = patches.astype(jnp.bfloat16)

    # OIHW -> HWIO -> (K, Cout): spatial taps folded into the contraction dim.
    w = jnp.transpose(kernel_oihw, (2, 3, 1, 0)).reshape(K, Cout)
    w = jnp.pad(w, ((0, Kp - K), (0, Coutp - Cout))).astype(jnp.bfloat16)
    b2 = jnp.pad(bias.astype(jnp.float32), (0, Coutp - Cout)).reshape(1, Coutp)

    grid = (N, Mp // TM)
    out_p = pl.pallas_call(
        _im2col_matmul_kernel,
        out_shape=jax.ShapeDtypeStruct((N, Mp, Coutp), out_dtype),
        grid_spec=pltpu.PrefetchScalarGridSpec(
            num_scalar_prefetch=0,
            grid=grid,
            in_specs=[
                pl.BlockSpec((1, TM, Kp), lambda n, m: (n, m, 0)),
                pl.BlockSpec((Kp, Coutp), lambda n, m: (0, 0)),
                pl.BlockSpec((1, Coutp), lambda n, m: (0, 0)),
            ],
            out_specs=pl.BlockSpec((1, TM, Coutp), lambda n, m: (n, m, 0)),
        ),
        compiler_params=pltpu.CompilerParams(
            dimension_semantics=("parallel", "parallel")),
    )(patches, w, b2)

    # Strip padding, back to NCHW to match torch.nn.functional.conv2d.
    out = out_p[:, :M, :Cout].reshape(N, Ho, Wo, Cout)
    return jnp.transpose(out, (0, 3, 1, 2))


if __name__ == "__main__":
    key = jax.random.PRNGKey(0)
    k1, k2, k3, k4 = jax.random.split(key, 4)

    # Small shapes consistent with a pruned Conv2d: N=2, Cin=4, 16x16, Cout=8, 3x3.
    N, Cin, H, W = 2, 4, 16, 16
    Cout, KH, KW = 8, 3, 3

    x = jax.random.normal(k1, (N, Cin, H, W), jnp.float32)
    kernel = jax.random.normal(k2, (Cout, Cin, KH, KW), jnp.float32)
    # Emulate a pruned ("sparse") kernel: ~50% of weights are exactly zero.
    prune_mask = (jax.random.uniform(k3, kernel.shape) > 0.5).astype(jnp.float32)
    kernel = kernel * prune_mask
    bias = jax.random.normal(k4, (Cout,), jnp.float32)

    out = sparse_conv2d(x, kernel, bias, padding='same', strides=1)
    out = jax.block_until_ready(out)

    # Reference using the same bf16-quantized operands (the kernel feeds the
    # MXU bf16 operands with f32 accumulation), so tolerances stay tight.
    xq = x.astype(jnp.bfloat16).astype(jnp.float32)
    kq = kernel.astype(jnp.bfloat16).astype(jnp.float32)
    ref = jax.lax.conv_general_dilated(
        xq, kq, window_strides=(1, 1),
        padding=[((KH - 1) // 2, KH - 1 - (KH - 1) // 2),
                 ((KW - 1) // 2, KW - 1 - (KW - 1) // 2)],
        dimension_numbers=('NCHW', 'OIHW', 'NCHW'),
        preferred_element_type=jnp.float32)
    ref = ref + bias[None, :, None, None]

    assert out.shape == ref.shape == (N, Cout, H, W), (out.shape, ref.shape)
    max_err = float(jnp.max(jnp.abs(out - ref)))
    assert jnp.allclose(out, ref, atol=3e-3, rtol=3e-3), max_err
    print("KERNEL_OK")
</pallas_src>

<mosaic_0001>
module attributes {stable_mosaic.version = 11 : i64} {
  func.func @_im2col_matmul_kernel(%arg0: i32, %arg1: i32, %arg2: memref<1x128x48xbf16, #tpu.memory_space<vmem>>, %arg3: memref<48x128xbf16, #tpu.memory_space<vmem>>, %arg4: memref<1x128xf32, #tpu.memory_space<vmem>>, %arg5: memref<1x128x128xf32, #tpu.memory_space<vmem>>) attributes {dimension_semantics = [#tpu.dimension_semantics<parallel>, #tpu.dimension_semantics<parallel>], iteration_bounds = array<i64: 2, 2>, scalar_prefetch = 0 : i64, scratch_operands = 0 : i64, tpu.core_type = #tpu.core_type<tc>, window_params = [{transform_indices = @transform_0, window_bounds = array<i64: 1, 128, 48>}, {pipeline_mode = #tpu.pipeline_mode<synchronous>, transform_indices = @transform_1, window_bounds = array<i64: 48, 128>}, {pipeline_mode = #tpu.pipeline_mode<synchronous>, transform_indices = @transform_2, window_bounds = array<i64: 1, 128>}, {transform_indices = @transform_3, window_bounds = array<i64: 1, 128, 128>}]} {
    %c0 = arith.constant 0 : index
    %c0_0 = arith.constant 0 : index
    %c0_1 = arith.constant 0 : index
    %0 = vector.load %arg2[%c0, %c0_0, %c0_1] : memref<1x128x48xbf16, #tpu.memory_space<vmem>>, vector<1x128x48xbf16>
    %1 = vector.shape_cast %0 : vector<1x128x48xbf16> to vector<128x48xbf16>
    %c0_2 = arith.constant 0 : index
    %c0_3 = arith.constant 0 : index
    %2 = vector.load %arg3[%c0_2, %c0_3] : memref<48x128xbf16, #tpu.memory_space<vmem>>, vector<48x128xbf16>
    %cst = arith.constant dense<0.000000e+00> : vector<128x128xf32>
    %3 = tpu.matmul %1, %2, %cst {dimension_numbers = #tpu.dot_dimension_numbers<[1], [0], [0], [1], [0, 0, 1, 1], [], []>} : vector<128x48xbf16>, vector<48x128xbf16>, vector<128x128xf32> -> vector<128x128xf32>
    %c0_4 = arith.constant 0 : index
    %c0_5 = arith.constant 0 : index
    %4 = vector.load %arg4[%c0_4, %c0_5] : memref<1x128xf32, #tpu.memory_space<vmem>>, vector<1x128xf32>
    %5 = vector.broadcast %4 : vector<1x128xf32> to vector<128x128xf32>
    %6 = arith.addf %3, %5 : vector<128x128xf32>
    %c0_6 = arith.constant 0 : index
    %c0_7 = arith.constant 0 : index
    %c0_8 = arith.constant 0 : index
    %7 = vector.load %arg5[%c0_6, %c0_7, %c0_8] : memref<1x128x128xf32, #tpu.memory_space<vmem>>, vector<1x128x128xf32>
    %8 = vector.shape_cast %7 : vector<1x128x128xf32> to vector<128x128xf32>
    %9 = vector.shape_cast %6 : vector<128x128xf32> to vector<1x128x128xf32>
    tpu.vector_store %arg5[%c0_6, %c0_7, %c0_8], %9 {strides = array<i32>} : memref<1x128x128xf32, #tpu.memory_space<vmem>>, vector<1x128x128xf32>,
    return
  }
  func.func @transform_0(%arg0: i32, %arg1: i32) -> (i32, i32, i32) {
    %c0_i32 = arith.constant 0 : i32
    %c0_i32_0 = arith.constant 0 : i32
    return %arg0, %arg1, %c0_i32 : i32, i32, i32
  }
  func.func @transform_1(%arg0: i32, %arg1: i32) -> (i32, i32) {
    %c0_i32 = arith.constant 0 : i32
    %c0_i32_0 = arith.constant 0 : i32
    %c0_i32_1 = arith.constant 0 : i32
    return %c0_i32, %c0_i32_0 : i32, i32
  }
  func.func @transform_2(%arg0: i32, %arg1: i32) -> (i32, i32) {
    %c0_i32 = arith.constant 0 : i32
    %c0_i32_0 = arith.constant 0 : i32
    %c0_i32_1 = arith.constant 0 : i32
    return %c0_i32, %c0_i32_0 : i32, i32
  }
  func.func @transform_3(%arg0: i32, %arg1: i32) -> (i32, i32, i32) {
    %c0_i32 = arith.constant 0 : i32
    %c0_i32_0 = arith.constant 0 : i32
    return %arg0, %arg1, %c0_i32 : i32, i32, i32
  }
}

</mosaic_0001>

<llo_original>
// kernel: tpu_custom_call.1
$region0: #{tpu_custom_call.1}
  #allocation0 [shape = 'u32[]', space=smem, size = 0x4, offset = 0x4, fixed_abs, tag = 'smem constant byte address 0x4 - core index']
  #allocation1 [shape = 'u32[144,128]{1,0:T(1,128)}', space=vmem, size = 0x12000, scoped, tag = 'internal scratch']
  %s0 = inlined_call_operand.vmem [shape: bf16[2,256,48], index: 0, kind: input, shape index: {}]
  %s1 = inlined_call_operand.vmem [shape: bf16[48,128], index: 1, kind: input, shape index: {}]
  %s2 = inlined_call_operand.vmem [shape: f32[1,128], index: 2, kind: input, shape index: {}]
  %s3 = inlined_call_operand.hbm [shape: f32[2,256,128], index: 3, kind: output, shape index: {}]
  %s4 = sld [smem:[#allocation0]]
  $region45: #{tpu_custom_call.1} parent=0
    _
  %s6 = ssub.s32 1, %s4
  %s7 = scalar_select 0, %s6, %s4
  $region1: #{tpu_custom_call.1} parent=0
    #allocation2 [shape = 'u8[131072]{0}', space=vmem, size = 0x20000, scoped, tag = 'output window, operand 0']
    #allocation3 [shape = 's32[2]{0}', space=sflag, size = 0x8, scoped, tag = 'scoped memory for tpu_custom_call.1']
    %8 = vsyncpa [#allocation3], 0
    %s9 = scalar_lea.sflag [#allocation3], 1
    %10 = vsyncpa %s9, 0
    loop: start=0, step=1, limit=6
    $region2: #{tpu_custom_call.1} parent=1 // loop_pre_header
      _
    $region3: #{tpu_custom_call.1} parent=1 // loop_header
      %s12 = sphi 0, %s16
      %p13 = scmp.ge.s32.totalorder %s12, 6
      %s19 = sphi 0, %s31
      %s20 = sphi 0, %s27
      %s21 = sphi 0, %s19
      %s22 = sphi 0, %s20
      %s23 = sphi 0, %s21
      %s24 = sphi 0, %s22
      %s36 = sphi 0, %s38
      %s39 = sphi 0, %s36
      %s40 = sphi 0, %s39
      %s56 = sphi 0, %s40
      %s60 = sphi 0, %s60
      %s62 = sphi 0, %s60
      %s63 = sphi 0, %s62
      %s77 = sphi 0, %s63
      %s81 = sphi 0, %s81
      %s83 = sphi 0, %s81
      %s84 = sphi 0, %s83
      %s98 = sphi 0, %s84
      %s106 = sphi 0, %s108
      %s109 = sphi 0, %s106
      %s110 = sphi 0, %s109
      %s126 = sphi 0, %s110
    $region4: #{tpu_custom_call.1} parent=1 // loop_header_branch
      %15 = sbr.rel (%p13) target = $region8
    $region5: #{tpu_custom_call.1} parent=1 // loop_body
      %s17 = ssub.s32 %s12, 1
      %s18 = ssub.s32 %s12, 2
      %s25 = sadd.s32 1, %s20
      %p26 = scmp.ge.s32.totalorder %s25, 2
      %s27 = scalar_select %p26, 0, %s25
      %s28 = sadd.s32 1, %s19
      %s29 = scalar_select %p26, %s28, %s19
      %p30 = scmp.ge.s32.totalorder %s29, 2
      %s31 = scalar_select %p30, 0, %s29
      %s32 = ssub.s32 %s19, %s31
      %s33 = ssub.s32 %s20, %s27
      %s34 = sor.u32 %s32, %s33
      %p35 = scmp.eq.s32.totalorder %s34, 0
      %s37 = sadd.s32 %s36, 1
      %s38 = scalar_select %p35, %s36, %s37
      %p41 = pneg %p35
      %p42 = scmp.eq.s32.totalorder %s12, 3
      %p43 = por %p41, %p42
      %p44 = scmp.ne.s32.totalorder %s36, %s39
      %p45 = scmp.eq.s32.totalorder %s12, 0
      %p46 = por %p44, %p45
      %p47 = scmp.ne.s32.totalorder %s36, %s39
      %p48 = scmp.eq.s32.totalorder %s17, 3
      %p49 = por %p47, %p48
      %p50 = scmp.ne.s32.totalorder %s39, %s40
      %p51 = scmp.eq.s32.totalorder %s17, 0
      %p52 = por %p50, %p51
      %p53 = scmp.ne.s32.totalorder %s39, %s40
      %p54 = scmp.eq.s32.totalorder %s18, 3
      %p55 = por %p53, %p54
      %p57 = scmp.ne.s32.totalorder %s40, %s56
      %p58 = scmp.eq.s32.totalorder %s18, 0
      %p59 = por %p57, %p58
      %s61 = sadd.s32 %s60, 1
      %p64 = scmp.eq.s32.totalorder %s12, 3
      %p65 = scmp.ne.s32.totalorder %s60, %s62
      %p66 = scmp.eq.s32.totalorder %s12, 0
      %p67 = por %p65, %p66
      %p68 = scmp.ne.s32.totalorder %s60, %s62
      %p69 = scmp.eq.s32.totalorder %s17, 3
      %p70 = por %p68, %p69
      %p71 = scmp.ne.s32.totalorder %s62, %s63
      %p72 = scmp.eq.s32.totalorder %s17, 0
      %p73 = por %p71, %p72
      %p74 = scmp.ne.s32.totalorder %s62, %s63
      %p75 = scmp.eq.s32.totalorder %s18, 3
      %p76 = por %p74, %p75
      %p78 = scmp.ne.s32.totalorder %s63, %s77
      %p79 = scmp.eq.s32.totalorder %s18, 0
      %p80 = por %p78, %p79
      %s82 = sadd.s32 %s81, 1
      %p85 = scmp.eq.s32.totalorder %s12, 3
      %p86 = scmp.ne.s32.totalorder %s81, %s83
      %p87 = scmp.eq.s32.totalorder %s12, 0
      %p88 = por %p86, %p87
      %p89 = scmp.ne.s32.totalorder %s81, %s83
      %p90 = scmp.eq.s32.totalorder %s17, 3
      %p91 = por %p89, %p90
      %p92 = scmp.ne.s32.totalorder %s83, %s84
      %p93 = scmp.eq.s32.totalorder %s17, 0
      %p94 = por %p92, %p93
      %p95 = scmp.ne.s32.totalorder %s83, %s84
      %p96 = scmp.eq.s32.totalorder %s18, 3
      %p97 = por %p95, %p96
      %p99 = scmp.ne.s32.totalorder %s84, %s98
      %p100 = scmp.eq.s32.totalorder %s18, 0
      %p101 = por %p99, %p100
      %s102 = ssub.s32 %s19, %s31
      %s103 = ssub.s32 %s20, %s27
      %s104 = sor.u32 %s102, %s103
      %p105 = scmp.eq.s32.totalorder %s104, 0
      %s107 = sadd.s32 %s106, 1
      %s108 = scalar_select %p105, %s106, %s107
      %p111 = pneg %p105
      %p112 = scmp.eq.s32.totalorder %s12, 3
      %p113 = por %p111, %p112
      %p114 = scmp.ne.s32.totalorder %s106, %s109
      %p115 = scmp.eq.s32.totalorder %s12, 0
      %p116 = por %p114, %p115
      %p117 = scmp.ne.s32.totalorder %s106, %s109
      %p118 = scmp.eq.s32.totalorder %s17, 3
      %p119 = por %p117, %p118
      %p120 = scmp.ne.s32.totalorder %s109, %s110
      %p121 = scmp.eq.s32.totalorder %s17, 0
      %p122 = por %p120, %p121
      %p123 = scmp.ne.s32.totalorder %s109, %s110
      %p124 = scmp.eq.s32.totalorder %s18, 3
      %p125 = por %p123, %p124
      %p127 = scmp.ne.s32.totalorder %s110, %s126
      %p128 = scmp.eq.s32.totalorder %s18, 0
      %p129 = por %p127, %p128
      %p130 = scmp.le.s32.totalorder 1, %s12
      %p131 = scmp.lt.s32.totalorder %s12, 5
      %p132 = pnand %p130, %p131
      %p133 = pneg %p132
      // Predicated region
      $region9: #{tpu_custom_call.1} parent=5 // pred_check
        _
      $region10: #{tpu_custom_call.1} parent=5 // pred_check_branch
        %135 = sbr.rel (%p132) target = $region12
      $region11: #{tpu_custom_call.1} parent=5 // pred_region
        %s136 = ssub.s32 %s12, 1
        // Predicated region
        $region13: #{tpu_custom_call.1} parent=11 // pred_check
          %p137 = pneg %p73
        $region14: #{tpu_custom_call.1} parent=11 // pred_check_branch
          %139 = sbr.rel (%p137) target = $region16
        $region15: #{tpu_custom_call.1} parent=11 // pred_region
          _
        $region16: #{tpu_custom_call.1} parent=11 // pred_fallthru
          _
        // Predicated region
        $region17: #{tpu_custom_call.1} parent=11 // pred_check
          %p140 = pneg %p94
        $region18: #{tpu_custom_call.1} parent=11 // pred_check_branch
          %142 = sbr.rel (%p140) target = $region20
        $region19: #{tpu_custom_call.1} parent=11 // pred_region
          _
        $region20: #{tpu_custom_call.1} parent=11 // pred_fallthru
          _
      $region12: #{tpu_custom_call.1} parent=5 // pred_fallthru
        _
      %p143 = scmp.lt.s32.totalorder %s12, 4
      // Predicated region
      $region21: #{tpu_custom_call.1} parent=5 // pred_check
        %p144 = pneg %p143
      $region22: #{tpu_custom_call.1} parent=5 // pred_check_branch
        %146 = sbr.rel (%p144) target = $region24
      $region23: #{tpu_custom_call.1} parent=5 // pred_region
        // Predicated region
        $region25: #{tpu_custom_call.1} parent=23 // pred_check
          %p147 = pneg %p46
        $region26: #{tpu_custom_call.1} parent=23 // pred_check_branch
          %149 = sbr.rel (%p147) target = $region28
        $region27: #{tpu_custom_call.1} parent=23 // pred_region
          %s150 = smul.u32 16, %s20
          %p151 = scmp.lt.s32.totalorder %s19, 1
          %s152 = scalar_select %p151, %s19, 1
          %p153 = scmp.lt.s32.totalorder %s150, 31
          %s154 = scalar_select %p153, %s150, 31
          %s155 = smul.addr %s152, 32
          %s156 = sadd.s32 %s154, %s155
          %s157 = smul.addr %s156, 4
          %s158 = scalar_lea.vmem %s0, %s157
          %s159 = smul.u32 16, %s20
        $region28: #{tpu_custom_call.1} parent=23 // pred_fallthru
          _
      $region24: #{tpu_custom_call.1} parent=5 // pred_fallthru
        _
      %p160 = scmp.le.s32.totalorder 1, %s12
      %p161 = scmp.lt.s32.totalorder %s12, 5
      %p162 = pnand %p160, %p161
      %p163 = pneg %p162
      // Predicated region
      $region29: #{tpu_custom_call.1} parent=5 // pred_check
        _
      $region30: #{tpu_custom_call.1} parent=5 // pred_check_branch
        %165 = sbr.rel (%p162) target = $region32
      $region31: #{tpu_custom_call.1} parent=5 // pred_region
        %s166 = ssub.s32 %s12, 1
        %s167 = smul.u32 16, %s22
        %p168 = scmp.lt.s32.totalorder %s21, 1
        %s169 = scalar_select %p168, %s21, 1
        %p170 = scmp.lt.s32.totalorder %s167, 31
        %s171 = scalar_select %p170, %s167, 31
        %s172 = smul.addr %s169, 32
        %s173 = sadd.s32 %s171, %s172
        %s174 = smul.addr %s173, 4
        %s175 = scalar_lea.vmem %s0, %s174
        %p176 = pneg %p52
        %p177 = pneg %p49
        %p178 = pneg %p73
        %p179 = pneg %p70
        %p180 = pneg %p94
        %p181 = pneg %p91
        %p182 = pneg %p122
        %p183 = pneg %p119
        %s184 = sand.u32 %s109, 1
        %s185 = scalar_lea.sflag [#allocation3], %s184
        %s186 = sand.u32 %s109, 1
        %s187 = smul.addr %s186, 128
        %s188 = scalar_lea.vmem [#allocation2], %s187
        %s189 = smul.u32 16, %s22
        %p190 = scmp.lt.s32.totalorder %s21, 1
        %s191 = scalar_select %p190, %s21, 1
        %p192 = scmp.lt.s32.totalorder %s189, 31
        %s193 = scalar_select %p192, %s189, 31
        %s194 = smul.addr %s191, 32
        %s195 = sadd.s32 %s193, %s194
        %s196 = smul.addr %s195, 4
        %s197 = scalar_lea.vmem %s0, %s196
        %s198 = smul.u32 16, %s22
        %s199 = smul.u32 16, %s22
        %v201 = vld [vmem:[%s197] sm:$0xf]
        %v202 = vld [vmem:[%s197 + $0x4] sm:$0xf]
        %v203 = vld [vmem:[%s197 + $0x8] sm:$0xf]
        %v204 = vld [vmem:[%s197 + $0xc] sm:$0xf]
        %v205 = vld [vmem:[%s197 + $0x10] sm:$0xf]
        %v206 = vld [vmem:[%s197 + $0x14] sm:$0xf]
        %v207 = vld [vmem:[%s197 + $0x18] sm:$0xf]
        %v208 = vld [vmem:[%s197 + $0x1c] sm:$0xf]
        %v209 = vld [vmem:[%s197 + $0x20] sm:$0xf]
        %v210 = vld [vmem:[%s197 + $0x24] sm:$0xf]
        %v211 = vld [vmem:[%s197 + $0x28] sm:$0xf]
        %v212 = vld [vmem:[%s197 + $0x2c] sm:$0xf]
        %v213 = vld [vmem:[%s197 + $0x30] sm:$0xf]
        %v214 = vld [vmem:[%s197 + $0x34] sm:$0xf]
        %v215 = vld [vmem:[%s197 + $0x38] sm:$0xf]
        %v216 = vld [vmem:[%s197 + $0x3c] sm:$0xf]
        %v217 = vld [vmem:[%s1] sm:$0xf]
        %v218 = vld [vmem:[%s1 + $0x4] sm:$0xf]
        %v219 = vld [vmem:[%s1 + $0x8] sm:$0xf]
        %v220 = vld [vmem:[%s1 + $0xc] sm:$0xf]
        %v221 = vld [vmem:[%s1 + $0x10] sm:$0xf]
        %v222 = vld [vmem:[%s1 + $0x14] sm:$0xf]
        %v223 = vld [vmem:[%s2] sm:$0x1]
        %v225 = vlaneseq
        %v226 = vshrl.u32 %v225, 7
        %v227 = vsub.s32 0, %v226
        %v228 = vrot.slane %v223, %v227
        %v246 = vunpack.c.l.b16 %v201
        %v247 = vunpack.c.l.b16 %v202
        %v248 = vunpack.c.l.b16 %v203
        %v249 = vunpack.c.l.b16 %v204
        %v250 = vunpack.c.l.b16 %v205
        %v251 = vunpack.c.l.b16 %v206
        %v252 = vunpack.c.l.b16 %v207
        %v253 = vunpack.c.l.b16 %v208
        %v254 = vunpack.c.l.b16 %v209
        %v255 = vunpack.c.l.b16 %v210
        %v256 = vunpack.c.l.b16 %v211
        %v257 = vunpack.c.l.b16 %v212
        %v258 = vunpack.c.l.b16 %v213
        %v259 = vunpack.c.l.b16 %v214
        %v260 = vunpack.c.l.b16 %v215
        %v261 = vunpack.c.l.b16 %v216
        %v262 = vpack.c.b16 %v247, %v246
        %v263 = vpack.c.b16 %v249, %v248
        %v264 = vpack.c.b16 %v251, %v250
        %v265 = vpack.c.b16 %v253, %v252
        %v266 = vpack.c.b16 %v255, %v254
        %v267 = vpack.c.b16 %v257, %v256
        %v268 = vpack.c.b16 %v259, %v258
        %v269 = vpack.c.b16 %v261, %v260
        %v276 = vunpack.c.l.b16 %v217
        %v277 = vunpack.c.l.b16 %v218
        %v278 = vunpack.c.l.b16 %v219
        %v279 = vunpack.c.l.b16 %v220
        %v280 = vunpack.c.l.b16 %v221
        %v281 = vunpack.c.l.b16 %v222
        %v282 = vpack.c.b16 %v277, %v276
        %v283 = vpack.c.b16 %v279, %v278
        %v284 = vpack.c.b16 %v281, %v280
        %vm288 = vcmask 392192
        %v290 = vsel %vm288, %v262, 0
        %v293 = vsel %vm288, %v263, 0
        %v296 = vsel %vm288, %v264, 0
        %v299 = vsel %vm288, %v265, 0
        %v302 = vsel %vm288, %v266, 0
        %v305 = vsel %vm288, %v267, 0
        %v308 = vsel %vm288, %v268, 0
        %v311 = vsel %vm288, %v269, 0
        %313 = vmatprep.subr.bf16.mxu0 0
        %314 = vmatpush1.bf16.msra.mxu0 %v282
        %315 = vmatprep.subr.bf16.mxu0 0
        %316 = vmatpush1.bf16.msra.mxu0 %v283
        %317 = vmatprep.subr.bf16.mxu0 0
        %318 = vmatpush1.bf16.msra.mxu0 %v284
        %319 = vmatprep.subr.bf16.mxu0 0
        %320 = vmatpush1.bf16.msra.mxu0 0
        %321 = vmatprep.subr.bf16.mxu0 0
        %322 = vmatpush1.bf16.msra.mxu0 0
        %323 = vmatprep.subr.bf16.mxu0 0
        %324 = vmatpush1.bf16.msra.mxu0 0
        %325 = vmatprep.subr.bf16.mxu0 0
        %326 = vmatpush1.bf16.msra.mxu0 0
        %327 = vmatprep.subr.bf16.mxu0 0
        %328 = vmatpush1.bf16.msra.mxu0 0
        %329 = vmatprep.subr.bf16.mxu0 0
        %330 = vmatpush1.bf16.msra.mxu0 0
        %331 = vmatprep.subr.bf16.mxu0 0
        %332 = vmatpush1.bf16.msra.mxu0 0
        %333 = vmatprep.subr.bf16.mxu0 0
        %334 = vmatpush1.bf16.msra.mxu0 0
        %335 = vmatprep.subr.bf16.mxu0 0
        %336 = vmatpush1.bf16.msra.mxu0 0
        %337 = vmatprep.subr.bf16.mxu0 0
        %338 = vmatpush1.bf16.msra.mxu0 0
        %339 = vmatprep.subr.bf16.mxu0 0
        %340 = vmatpush1.bf16.msra.mxu0 0
        %341 = vmatprep.subr.bf16.mxu0 0
        %342 = vmatpush1.bf16.msra.mxu0 0
        %343 = vmatprep.subr.bf16.mxu0 0
        %344 = vmatpush1.bf16.msra.mxu0 0
        %345 = vmatprep.mubr.bf16.mxu0 0
        %346 = vmatmul.mubr.bf16.gmra.mrb[0].mxu0 %v290
        %v347 = vpop.f32.mrb[0].mxu0
        %v348 = vadd.f32 %v228, %v347
        %v349 = vpop.f32.mrb[0].mxu0
        %v350 = vpop.f32.mrb[0].mxu0
        %v351 = vadd.f32 %v228, %v350
        %v352 = vpop.f32.mrb[0].mxu0
        %353 = vmatprep.mubr.bf16.mxu0 0
        %354 = vmatmul.mubr.bf16.gmra.mrb[0].mxu0 %v293
        %v355 = vpop.f32.mrb[0].mxu0
        %v356 = vadd.f32 %v228, %v355
        %v357 = vpop.f32.mrb[0].mxu0
        %v358 = vpop.f32.mrb[0].mxu0
        %v359 = vadd.f32 %v228, %v358
        %v360 = vpop.f32.mrb[0].mxu0
        %361 = vmatprep.mubr.bf16.mxu0 0
        %362 = vmatmul.mubr.bf16.gmra.mrb[0].mxu0 %v296
        %v363 = vpop.f32.mrb[0].mxu0
        %v364 = vadd.f32 %v228, %v363
        %v365 = vpop.f32.mrb[0].mxu0
        %v366 = vpop.f32.mrb[0].mxu0
        %v367 = vadd.f32 %v228, %v366
        %v368 = vpop.f32.mrb[0].mxu0
        %369 = vmatprep.mubr.bf16.mxu0 0
        %370 = vmatmul.mubr.bf16.gmra.mrb[0].mxu0 %v299
        %v371 = vpop.f32.mrb[0].mxu0
        %v372 = vadd.f32 %v228, %v371
        %v373 = vpop.f32.mrb[0].mxu0
        %v374 = vpop.f32.mrb[0].mxu0
        %v375 = vadd.f32 %v228, %v374
        %v376 = vpop.f32.mrb[0].mxu0
        %377 = vmatprep.mubr.bf16.mxu0 0
        %378 = vmatmul.mubr.bf16.gmra.mrb[0].mxu0 %v302
        %v379 = vpop.f32.mrb[0].mxu0
        %v380 = vadd.f32 %v228, %v379
        %v381 = vpop.f32.mrb[0].mxu0
        %v382 = vpop.f32.mrb[0].mxu0
        %v383 = vadd.f32 %v228, %v382
        %v384 = vpop.f32.mrb[0].mxu0
        %385 = vmatprep.mubr.bf16.mxu0 0
        %386 = vmatmul.mubr.bf16.gmra.mrb[0].mxu0 %v305
        %v387 = vpop.f32.mrb[0].mxu0
        %v388 = vadd.f32 %v228, %v387
        %v389 = vpop.f32.mrb[0].mxu0
        %v390 = vpop.f32.mrb[0].mxu0
        %v391 = vadd.f32 %v228, %v390
        %v392 = vpop.f32.mrb[0].mxu0
        %393 = vmatprep.mubr.bf16.mxu0 0
        %394 = vmatmul.mubr.bf16.gmra.mrb[0].mxu0 %v308
        %v395 = vpop.f32.mrb[0].mxu0
        %v396 = vadd.f32 %v228, %v395
        %v397 = vpop.f32.mrb[0].mxu0
        %v398 = vpop.f32.mrb[0].mxu0
        %v399 = vadd.f32 %v228, %v398
        %v400 = vpop.f32.mrb[0].mxu0
        %401 = vmatprep.mubr.bf16.mxu0 0
        %402 = vmatmul.mubr.bf16.gmra.mrb[0].mxu0 %v311
        %v403 = vpop.f32.mrb[0].mxu0
        %v404 = vadd.f32 %v228, %v403
        %v405 = vpop.f32.mrb[0].mxu0
        %v406 = vpop.f32.mrb[0].mxu0
        %v407 = vadd.f32 %v228, %v406
        %v408 = vpop.f32.mrb[0].mxu0
        %409 = vdwg.mxu0
        %410 = vst [vmem:[%s188] sm:$0xff] %v348
        %411 = vst [vmem:[%s188 + $0x8] sm:$0xff] %v351
        %412 = vst [vmem:[%s188 + $0x10] sm:$0xff] %v356
        %413 = vst [vmem:[%s188 + $0x18] sm:$0xff] %v359
        %414 = vst [vmem:[%s188 + $0x20] sm:$0xff] %v364
        %415 = vst [vmem:[%s188 + $0x28] sm:$0xff] %v367
        %416 = vst [vmem:[%s188 + $0x30] sm:$0xff] %v372
        %417 = vst [vmem:[%s188 + $0x38] sm:$0xff] %v375
        %418 = vst [vmem:[%s188 + $0x40] sm:$0xff] %v380
        %419 = vst [vmem:[%s188 + $0x48] sm:$0xff] %v383
        %420 = vst [vmem:[%s188 + $0x50] sm:$0xff] %v388
        %421 = vst [vmem:[%s188 + $0x58] sm:$0xff] %v391
        %422 = vst [vmem:[%s188 + $0x60] sm:$0xff] %v396
        %423 = vst [vmem:[%s188 + $0x68] sm:$0xff] %v399
        %424 = vst [vmem:[%s188 + $0x70] sm:$0xff] %v404
        %425 = vst [vmem:[%s188 + $0x78] sm:$0xff] %v407
        %s426 = sand.u32 %s109, 1
        %s427 = scalar_lea.sflag [#allocation3], %s426
        %s428 = sand.u32 %s109, 1
        %s429 = smul.addr %s428, 128
        %s430 = scalar_lea.vmem [#allocation2], %s429
        // Predicated region
        $region33: #{tpu_custom_call.1} parent=31 // pred_check
          %p431 = pneg %p119
        $region34: #{tpu_custom_call.1} parent=31 // pred_check_branch
          %433 = sbr.rel (%p431) target = $region36
        $region35: #{tpu_custom_call.1} parent=31 // pred_region
          %s434 = smul.u32 16, %s22
          %s436 = ssub.s32 2048, 2048
          %437 = vsyncadd %s427, %s436
          %s438 = smul.addr %s21, 32
          %s439 = sadd.s32 %s434, %s438
          %s440 = smul.addr %s439, 128
          %s441 = scalar_lea.hbm %s3, %s440
          %s442 = sshll.u32 %s430, 4
          %s443 = int_to_ptr.vmem [resolvable:$true] %s442
          %448 = dma.vmem_to_hbm [thread:$0]  %s443, 2048, %s441, %s427, 128, 128, 8
        $region36: #{tpu_custom_call.1} parent=31 // pred_fallthru
          _
      $region32: #{tpu_custom_call.1} parent=5 // pred_fallthru
        _
      %p449 = scmp.le.s32.totalorder 2, %s12
      // Predicated region
      $region37: #{tpu_custom_call.1} parent=5 // pred_check
        %p450 = pneg %p449
      $region38: #{tpu_custom_call.1} parent=5 // pred_check_branch
        %452 = sbr.rel (%p450) target = $region40
      $region39: #{tpu_custom_call.1} parent=5 // pred_region
        %s453 = ssub.s32 %s12, 2
        // Predicated region
        $region41: #{tpu_custom_call.1} parent=39 // pred_check
          %p454 = pneg %p125
        $region42: #{tpu_custom_call.1} parent=39 // pred_check_branch
          %456 = sbr.rel (%p454) target = $region44
        $region43: #{tpu_custom_call.1} parent=39 // pred_region
          %s457 = sand.u32 %s110, 1
          %s458 = scalar_lea.sflag [#allocation3], %s457
          %s459 = sand.u32 %s110, 1
          %s460 = smul.addr %s459, 128
          %s461 = scalar_lea.vmem [#allocation2], %s460
          %462 = dma.done %s458, 2048
        $region44: #{tpu_custom_call.1} parent=39 // pred_fallthru
          _
      $region40: #{tpu_custom_call.1} parent=5 // pred_fallthru
        _
    $region6: #{tpu_custom_call.1} parent=1 // loop_footer
      %s16 = sadd.s32 1, %s12
    $region7: #{tpu_custom_call.1} parent=1 // loop_footer_branch
      %11 = sbr.rel target = $region3
    $region8: #{tpu_custom_call.1} parent=1 // loop_exit
      _
    %463 = vsyncpa [#allocation3], 1
    %s464 = scalar_lea.sflag [#allocation3], 1
    %465 = vsyncpa %s464, 1

</llo_original>
